<compile_context>
chip_gen: v5e
topology: v5e:2x2
jax: 0.10.0
libtpu: 0.0.40
codegen_flags: <defaults>
</compile_context>

<pallas_src>
import functools

import jax
import jax.numpy as jnp
from jax import lax
from jax.experimental import pallas as pl
from jax.experimental.pallas import tpu as pltpu


DROPOUT_P = 0.1


def rnn_seq_kernel(xw1b_ref,       # (Tt, B, H) f32   x@W1 + b1 + b2 (streamed)
                   mask_ref,       # (Tt, B, H) f32   dropout scale mask
                   h0_ref,         # (B, H)     f32   initial hidden (resident)
                   w2o_ref,        # (H, H+O)   bf16  [W2 | Wo] (resident)
                   bo_ref,         # (1, O)     f32   out-layer bias (resident)
                   out_ref,        # (Tt, B, O) f32   outputs
                   hid_ref,        # (Tt, B, H) f32   hiddens (post-dropout)
                   hw2_scratch,    # VMEM (B, H) f32  carried h_{t-1} @ W2
                   *, hidden_size, block_t):
    # Hoisted out of the unrolled time loop: resident weight + bias broadcast.
    w2o = w2o_ref[...]                                        # (H, H+O) bf16
    batch = out_ref.shape[1]
    bo = jnp.broadcast_to(bo_ref[...], (batch, bo_ref.shape[-1]))

    @pl.when(pl.program_id(0) == 0)
    def _init():
        # Seed the carry with h0 @ W2 (uses the fused weight; extra O columns
        # are discarded -- happens exactly once per call).
        hw2_scratch[...] = jnp.dot(
            h0_ref[...].astype(jnp.bfloat16), w2o,
            preferred_element_type=jnp.float32)[:, :hidden_size]

    def step(i, hw2):
        # pre_t = x_t @ W1 + b1 + b2 + h_{t-1} @ W2
        pre = xw1b_ref[i] + hw2                               # (B, H) f32
        hidden = jnp.tanh(pre) * mask_ref[i]                  # dropout (inverted)
        # One MXU push per step: hidden_t @ [W2 | Wo].
        fused = jnp.dot(hidden.astype(jnp.bfloat16), w2o,
                        preferred_element_type=jnp.float32)   # (B, H+O) f32
        hid_ref[i] = hidden
        out_ref[i] = fused[:, hidden_size:] + bo              # output_t
        return fused[:, :hidden_size]                         # -> next step's h@W2

    hw2_scratch[...] = lax.fori_loop(0, block_t, step, hw2_scratch[...],
                                     unroll=True)


@functools.partial(jax.jit, static_argnames=("time_block",))
def rnn_forward_seq(x_seq, h0, w1_bf, b12, w2o, bo, mask, *, time_block=8):
    """Runs the RNN cell over a whole sequence.

    x_seq: (T, B, I) f32; h0: (B, H) f32; mask: (T, B, H) f32
    w1_bf: (I, H) bf16; b12 = b1 + b2: (1, H) f32; w2o = [W2|Wo]: (H, H+O) bf16;
    bo: (1, O) f32.
    Returns (outputs (T, B, O) f32, hiddens (T, B, H) f32).
    """
    T, B, _ = x_seq.shape
    H = b12.shape[-1]
    O = bo.shape[-1]

    # Hoisted input projection: one throughput-friendly matmul with M = T*B,
    # with both biases folded in so the serial loop only does one add per step.
    xw1b = jnp.einsum("tbi,ih->tbh", x_seq.astype(jnp.bfloat16), w1_bf,
                      preferred_element_type=jnp.float32) + b12

    # Block the time axis; pad T up to a multiple of the block (padded steps
    # are computed but discarded).
    Tt = min(time_block, T)
    n_blocks = -(-T // Tt)
    T_pad = n_blocks * Tt
    if T_pad != T:
        pad = ((0, T_pad - T), (0, 0), (0, 0))
        xw1b = jnp.pad(xw1b, pad)
        mask = jnp.pad(mask, pad)

    outputs, hiddens = pl.pallas_call(
        functools.partial(rnn_seq_kernel, hidden_size=H, block_t=Tt),
        out_shape=(jax.ShapeDtypeStruct((T_pad, B, O), jnp.float32),
                   jax.ShapeDtypeStruct((T_pad, B, H), jnp.float32)),
        grid_spec=pltpu.PrefetchScalarGridSpec(
            num_scalar_prefetch=0,
            grid=(n_blocks,),
            in_specs=[
                pl.BlockSpec((Tt, B, H), lambda t: (t, 0, 0)),   # xw1b block
                pl.BlockSpec((Tt, B, H), lambda t: (t, 0, 0)),   # mask block
                pl.BlockSpec((B, H),     lambda t: (0, 0)),      # h0 (resident)
                pl.BlockSpec((H, H + O), lambda t: (0, 0)),      # [W2|Wo] (resident)
                pl.BlockSpec((1, O),     lambda t: (0, 0)),      # bo (resident)
            ],
            out_specs=[
                pl.BlockSpec((Tt, B, O), lambda t: (t, 0, 0)),   # outputs
                pl.BlockSpec((Tt, B, H), lambda t: (t, 0, 0)),   # hiddens
            ],
            scratch_shapes=[pltpu.VMEM((B, H), jnp.float32)],
        ),
        compiler_params=pltpu.CompilerParams(
            dimension_semantics=("arbitrary",)),   # recurrence: time is sequential
    )(xw1b, mask, h0, w2o, bo)

    if T_pad != T:
        outputs = outputs[:T]
        hiddens = hiddens[:T]
    return outputs, hiddens


def init_params(key, input_size, hidden_size, output_size):
    """PyTorch-style Linear init: U(-1/sqrt(fan_in), 1/sqrt(fan_in)).
    Weights stored as (in_features, out_features)."""
    def linear(k, fan_in, fan_out):
        kw, kb = jax.random.split(k)
        bound = 1.0 / jnp.sqrt(float(fan_in))
        w = jax.random.uniform(kw, (fan_in, fan_out), jnp.float32, -bound, bound)
        b = jax.random.uniform(kb, (1, fan_out), jnp.float32, -bound, bound)
        return w, b

    k1, k2, k3 = jax.random.split(key, 3)
    w1, b1 = linear(k1, input_size, hidden_size)
    w2, b2 = linear(k2, hidden_size, hidden_size)
    wo, bo = linear(k3, hidden_size, output_size)
    return w1, b1, w2, b2, wo, bo


def pack_params(w1, b1, w2, b2, wo, bo):
    """bf16 MXU operands; W2/Wo fused column-wise; biases stay f32."""
    w1_bf = w1.astype(jnp.bfloat16)                              # (I, H)
    b12 = (b1 + b2).astype(jnp.float32)                          # (1, H)
    w2o = jnp.concatenate([w2, wo], axis=1).astype(jnp.bfloat16)  # (H, H+O)
    return w1_bf, b12, w2o, bo.astype(jnp.float32)


def make_dropout_mask(key, shape, p, training):
    """Inverted-dropout scale mask: 1/(1-p) for kept units, 0 for dropped."""
    if not training or p == 0.0:
        return jnp.ones(shape, jnp.float32)
    keep = jax.random.bernoulli(key, 1.0 - p, shape)
    return keep.astype(jnp.float32) * (1.0 / (1.0 - p))


def rnn_reference(x_seq, h0, w1, b1, w2, b2, wo, bo, mask):
    """Pure-JAX reference (same bf16 dot operands) for a sanity check."""
    w1b, w2b, wob = (w.astype(jnp.bfloat16) for w in (w1, w2, wo))
    outs, hids = [], []
    h = h0
    for t in range(x_seq.shape[0]):
        pre = (jnp.dot(x_seq[t].astype(jnp.bfloat16), w1b,
                       preferred_element_type=jnp.float32) + b1
               + jnp.dot(h.astype(jnp.bfloat16), w2b,
                         preferred_element_type=jnp.float32) + b2)
        h = jnp.tanh(pre) * mask[t]
        o = (jnp.dot(h.astype(jnp.bfloat16), wob,
                     preferred_element_type=jnp.float32) + bo)
        outs.append(o)
        hids.append(h)
    return jnp.stack(outs), jnp.stack(hids)


if __name__ == "__main__":
    # Small but TPU-natural sizes: lane-dense (H, O multiples of 128),
    # sublane-dense batch, two time blocks to exercise the cross-block carry.
    input_size, hidden_size, output_size = 128, 128, 128
    batch, seq_len, time_block = 8, 16, 8

    key = jax.random.PRNGKey(0)
    kp, kx, kd = jax.random.split(key, 3)

    w1, b1, w2, b2, wo_f32, bo_f32 = init_params(
        kp, input_size, hidden_size, output_size)
    w1_bf, b12, w2o, bo = pack_params(w1, b1, w2, b2, wo_f32, bo_f32)

    x_seq = jax.random.normal(kx, (seq_len, batch, input_size), jnp.float32)
    # initHidden() is zeros(1, H); standardized to (B, H) from step 0.
    h0 = jnp.zeros((batch, hidden_size), jnp.float32)
    # Training-mode dropout mask, independent per timestep.
    # TODO(synk): mask uses jax.random, so it will not bit-match torch's RNG stream.
    mask = make_dropout_mask(kd, (seq_len, batch, hidden_size), DROPOUT_P,
                             training=True)

    outputs, hiddens = rnn_forward_seq(x_seq, h0, w1_bf, b12, w2o, bo, mask,
                                       time_block=time_block)
    jax.block_until_ready((outputs, hiddens))

    assert outputs.shape == (seq_len, batch, output_size)
    assert hiddens.shape == (seq_len, batch, hidden_size)
    assert bool(jnp.all(jnp.isfinite(outputs))) and bool(jnp.all(jnp.isfinite(hiddens)))

    ref_out, ref_hid = rnn_reference(x_seq, h0, w1, b1, w2, b2, wo_f32, bo_f32,
                                     mask)
    max_err = max(float(jnp.max(jnp.abs(outputs - ref_out))),
                  float(jnp.max(jnp.abs(hiddens - ref_hid))))
    assert max_err < 5e-2, f"mismatch vs reference: {max_err}"

    print("KERNEL_OK")
</pallas_src>

<mosaic_0001>
module attributes {stable_mosaic.version = 11 : i64} {
  func.func @rnn_seq_kernel(%arg0: i32, %arg1: memref<8x8x128xf32, #tpu.memory_space<vmem>>, %arg2: memref<8x8x128xf32, #tpu.memory_space<vmem>>, %arg3: memref<8x128xf32, #tpu.memory_space<vmem>>, %arg4: memref<128x256xbf16, #tpu.memory_space<vmem>>, %arg5: memref<1x128xf32, #tpu.memory_space<vmem>>, %arg6: memref<8x8x128xf32, #tpu.memory_space<vmem>>, %arg7: memref<8x8x128xf32, #tpu.memory_space<vmem>>, %arg8: memref<8x128xf32, #tpu.memory_space<vmem>>) attributes {dimension_semantics = [#tpu.dimension_semantics<arbitrary>], iteration_bounds = array<i64: 2>, scalar_prefetch = 0 : i64, scratch_operands = 1 : i64, tpu.core_type = #tpu.core_type<tc>, window_params = [{transform_indices = @transform_0, window_bounds = array<i64: 8, 8, 128>}, {transform_indices = @transform_1, window_bounds = array<i64: 8, 8, 128>}, {pipeline_mode = #tpu.pipeline_mode<synchronous>, transform_indices = @transform_2, window_bounds = array<i64: 8, 128>}, {pipeline_mode = #tpu.pipeline_mode<synchronous>, transform_indices = @transform_3, window_bounds = array<i64: 128, 256>}, {pipeline_mode = #tpu.pipeline_mode<synchronous>, transform_indices = @transform_4, window_bounds = array<i64: 1, 128>}, {transform_indices = @transform_5, window_bounds = array<i64: 8, 8, 128>}, {transform_indices = @transform_6, window_bounds = array<i64: 8, 8, 128>}]} {
    %c0 = arith.constant 0 : index
    %c0_0 = arith.constant 0 : index
    %0 = vector.load %arg4[%c0, %c0_0] : memref<128x256xbf16, #tpu.memory_space<vmem>>, vector<128x256xbf16>
    %c0_1 = arith.constant 0 : index
    %c0_2 = arith.constant 0 : index
    %1 = vector.load %arg5[%c0_1, %c0_2] : memref<1x128xf32, #tpu.memory_space<vmem>>, vector<1x128xf32>
    %2 = vector.shape_cast %1 : vector<1x128xf32> to vector<1x128xf32>
    %3 = vector.broadcast %2 : vector<1x128xf32> to vector<8x128xf32>
    %c0_i32 = arith.constant 0 : i32
    %4 = arith.cmpi eq, %arg0, %c0_i32 : i32
    %5 = arith.extui %4 : i1 to i32
    %c0_i32_3 = arith.constant 0 : i32
    %6 = arith.cmpi ne, %5, %c0_i32_3 : i32
    scf.if %6 {
      %c0_80 = arith.constant 0 : index
      %c0_81 = arith.constant 0 : index
      %185 = vector.load %arg3[%c0_80, %c0_81] : memref<8x128xf32, #tpu.memory_space<vmem>>, vector<8x128xf32>
      %186 = arith.truncf %185 : vector<8x128xf32> to vector<8x128xbf16>
      %cst_82 = arith.constant dense<0.000000e+00> : vector<8x256xf32>
      %187 = tpu.matmul %186, %0, %cst_82 {dimension_numbers = #tpu.dot_dimension_numbers<[1], [0], [0], [1], [0, 0, 1, 1], [], []>} : vector<8x128xbf16>, vector<128x256xbf16>, vector<8x256xf32> -> vector<8x256xf32>
      %188 = vector.extract_strided_slice %187 {offsets = [0, 0], sizes = [8, 128], strides = [1, 1]} : vector<8x256xf32> to vector<8x128xf32>
      %c0_83 = arith.constant 0 : index
      %c0_84 = arith.constant 0 : index
      %189 = vector.load %arg8[%c0_83, %c0_84] : memref<8x128xf32, #tpu.memory_space<vmem>>, vector<8x128xf32>
      tpu.vector_store %arg8[%c0_83, %c0_84], %188 {strides = array<i32>} : memref<8x128xf32, #tpu.memory_space<vmem>>, vector<8x128xf32>,
    } else {
    }
    %c0_4 = arith.constant 0 : index
    %c0_5 = arith.constant 0 : index
    %7 = vector.load %arg8[%c0_4, %c0_5] : memref<8x128xf32, #tpu.memory_space<vmem>>, vector<8x128xf32>
    %c0_i32_6 = arith.constant 0 : i32
    %8 = arith.index_cast %c0_i32_6 : i32 to index
    %c0_7 = arith.constant 0 : index
    %c0_8 = arith.constant 0 : index
    %9 = vector.load %arg1[%8, %c0_7, %c0_8] : memref<8x8x128xf32, #tpu.memory_space<vmem>>, vector<1x8x128xf32>
    %10 = vector.shape_cast %9 : vector<1x8x128xf32> to vector<8x128xf32>
    %11 = arith.addf %10, %7 : vector<8x128xf32>
    %12 = math.tanh %11 : vector<8x128xf32>
    %13 = arith.index_cast %c0_i32_6 : i32 to index
    %c0_9 = arith.constant 0 : index
    %c0_10 = arith.constant 0 : index
    %14 = vector.load %arg2[%13, %c0_9, %c0_10] : memref<8x8x128xf32, #tpu.memory_space<vmem>>, vector<1x8x128xf32>
    %15 = vector.shape_cast %14 : vector<1x8x128xf32> to vector<8x128xf32>
    %16 = arith.mulf %12, %15 : vector<8x128xf32>
    %17 = arith.truncf %16 : vector<8x128xf32> to vector<8x128xbf16>
    %cst = arith.constant dense<0.000000e+00> : vector<8x256xf32>
    %18 = tpu.matmul %17, %0, %cst {dimension_numbers = #tpu.dot_dimension_numbers<[1], [0], [0], [1], [0, 0, 1, 1], [], []>} : vector<8x128xbf16>, vector<128x256xbf16>, vector<8x256xf32> -> vector<8x256xf32>
    %19 = arith.index_cast %c0_i32_6 : i32 to index
    %c0_11 = arith.constant 0 : index
    %c0_12 = arith.constant 0 : index
    %20 = vector.load %arg7[%19, %c0_11, %c0_12] : memref<8x8x128xf32, #tpu.memory_space<vmem>>, vector<1x8x128xf32>
    %21 = vector.shape_cast %20 : vector<1x8x128xf32> to vector<8x128xf32>
    %22 = vector.shape_cast %16 : vector<8x128xf32> to vector<1x8x128xf32>
    tpu.vector_store %arg7[%19, %c0_11, %c0_12], %22 {strides = array<i32>} : memref<8x8x128xf32, #tpu.memory_space<vmem>>, vector<1x8x128xf32>,
    %23 = vector.extract_strided_slice %18 {offsets = [0, 128], sizes = [8, 128], strides = [1, 1]} : vector<8x256xf32> to vector<8x128xf32>
    %24 = arith.addf %23, %3 : vector<8x128xf32>
    %25 = arith.index_cast %c0_i32_6 : i32 to index
    %c0_13 = arith.constant 0 : index
    %c0_14 = arith.constant 0 : index
    %26 = vector.load %arg6[%25, %c0_13, %c0_14] : memref<8x8x128xf32, #tpu.memory_space<vmem>>, vector<1x8x128xf32>
    %27 = vector.shape_cast %26 : vector<1x8x128xf32> to vector<8x128xf32>
    %28 = vector.shape_cast %24 : vector<8x128xf32> to vector<1x8x128xf32>
    tpu.vector_store %arg6[%25, %c0_13, %c0_14], %28 {strides = array<i32>} : memref<8x8x128xf32, #tpu.memory_space<vmem>>, vector<1x8x128xf32>,
    %29 = vector.extract_strided_slice %18 {offsets = [0, 0], sizes = [8, 128], strides = [1, 1]} : vector<8x256xf32> to vector<8x128xf32>
    %c1_i32 = arith.constant 1 : i32
    %30 = arith.index_cast %c1_i32 : i32 to index
    %c0_15 = arith.constant 0 : index
    %c0_16 = arith.constant 0 : index
    %31 = vector.load %arg1[%30, %c0_15, %c0_16] : memref<8x8x128xf32, #tpu.memory_space<vmem>>, vector<1x8x128xf32>
    %32 = vector.shape_cast %31 : vector<1x8x128xf32> to vector<8x128xf32>
    %33 = arith.addf %32, %29 : vector<8x128xf32>
    %34 = math.tanh %33 : vector<8x128xf32>
    %35 = arith.index_cast %c1_i32 : i32 to index
    %c0_17 = arith.constant 0 : index
    %c0_18 = arith.constant 0 : index
    %36 = vector.load %arg2[%35, %c0_17, %c0_18] : memref<8x8x128xf32, #tpu.memory_space<vmem>>, vector<1x8x128xf32>
    %37 = vector.shape_cast %36 : vector<1x8x128xf32> to vector<8x128xf32>
    %38 = arith.mulf %34, %37 : vector<8x128xf32>
    %39 = arith.truncf %38 : vector<8x128xf32> to vector<8x128xbf16>
    %cst_19 = arith.constant dense<0.000000e+00> : vector<8x256xf32>
    %40 = tpu.matmul %39, %0, %cst_19 {dimension_numbers = #tpu.dot_dimension_numbers<[1], [0], [0], [1], [0, 0, 1, 1], [], []>} : vector<8x128xbf16>, vector<128x256xbf16>, vector<8x256xf32> -> vector<8x256xf32>
    %41 = arith.index_cast %c1_i32 : i32 to index
    %c0_20 = arith.constant 0 : index
    %c0_21 = arith.constant 0 : index
    %42 = vector.load %arg7[%41, %c0_20, %c0_21] : memref<8x8x128xf32, #tpu.memory_space<vmem>>, vector<1x8x128xf32>
    %43 = vector.shape_cast %42 : vector<1x8x128xf32> to vector<8x128xf32>
    %44 = vector.shape_cast %38 : vector<8x128xf32> to vector<1x8x128xf32>
    tpu.vector_store %arg7[%41, %c0_20, %c0_21], %44 {strides = array<i32>} : memref<8x8x128xf32, #tpu.memory_space<vmem>>, vector<1x8x128xf32>,
    %45 = vector.extract_strided_slice %40 {offsets = [0, 128], sizes = [8, 128], strides = [1, 1]} : vector<8x256xf32> to vector<8x128xf32>
    %46 = arith.addf %45, %3 : vector<8x128xf32>
    %47 = arith.index_cast %c1_i32 : i32 to index
    %c0_22 = arith.constant 0 : index
    %c0_23 = arith.constant 0 : index
    %48 = vector.load %arg6[%47, %c0_22, %c0_23] : memref<8x8x128xf32, #tpu.memory_space<vmem>>, vector<1x8x128xf32>
    %49 = vector.shape_cast %48 : vector<1x8x128xf32> to vector<8x128xf32>
    %50 = vector.shape_cast %46 : vector<8x128xf32> to vector<1x8x128xf32>
    tpu.vector_store %arg6[%47, %c0_22, %c0_23], %50 {strides = array<i32>} : memref<8x8x128xf32, #tpu.memory_space<vmem>>, vector<1x8x128xf32>,
    %51 = vector.extract_strided_slice %40 {offsets = [0, 0], sizes = [8, 128], strides = [1, 1]} : vector<8x256xf32> to vector<8x128xf32>
    %c2_i32 = arith.constant 2 : i32
    %52 = arith.index_cast %c2_i32 : i32 to index
    %c0_24 = arith.constant 0 : index
    %c0_25 = arith.constant 0 : index
    %53 = vector.load %arg1[%52, %c0_24, %c0_25] : memref<8x8x128xf32, #tpu.memory_space<vmem>>, vector<1x8x128xf32>
    %54 = vector.shape_cast %53 : vector<1x8x128xf32> to vector<8x128xf32>
    %55 = arith.addf %54, %51 : vector<8x128xf32>
    %56 = math.tanh %55 : vector<8x128xf32>
    %57 = arith.index_cast %c2_i32 : i32 to index
    %c0_26 = arith.constant 0 : index
    %c0_27 = arith.constant 0 : index
    %58 = vector.load %arg2[%57, %c0_26, %c0_27] : memref<8x8x128xf32, #tpu.memory_space<vmem>>, vector<1x8x128xf32>
    %59 = vector.shape_cast %58 : vector<1x8x128xf32> to vector<8x128xf32>
    %60 = arith.mulf %56, %59 : vector<8x128xf32>
    %61 = arith.truncf %60 : vector<8x128xf32> to vector<8x128xbf16>
    %cst_28 = arith.constant dense<0.000000e+00> : vector<8x256xf32>
    %62 = tpu.matmul %61, %0, %cst_28 {dimension_numbers = #tpu.dot_dimension_numbers<[1], [0], [0], [1], [0, 0, 1, 1], [], []>} : vector<8x128xbf16>, vector<128x256xbf16>, vector<8x256xf32> -> vector<8x256xf32>
    %63 = arith.index_cast %c2_i32 : i32 to index
    %c0_29 = arith.constant 0 : index
    %c0_30 = arith.constant 0 : index
    %64 = vector.load %arg7[%63, %c0_29, %c0_30] : memref<8x8x128xf32, #tpu.memory_space<vmem>>, vector<1x8x128xf32>
    %65 = vector.shape_cast %64 : vector<1x8x128xf32> to vector<8x128xf32>
    %66 = vector.shape_cast %60 : vector<8x128xf32> to vector<1x8x128xf32>
    tpu.vector_store %arg7[%63, %c0_29, %c0_30], %66 {strides = array<i32>} : memref<8x8x128xf32, #tpu.memory_space<vmem>>, vector<1x8x128xf32>,
    %67 = vector.extract_strided_slice %62 {offsets = [0, 128], sizes = [8, 128], strides = [1, 1]} : vector<8x256xf32> to vector<8x128xf32>
    %68 = arith.addf %67, %3 : vector<8x128xf32>
    %69 = arith.index_cast %c2_i32 : i32 to index
    %c0_31 = arith.constant 0 : index
    %c0_32 = arith.constant 0 : index
    %70 = vector.load %arg6[%69, %c0_31, %c0_32] : memref<8x8x128xf32, #tpu.memory_space<vmem>>, vector<1x8x128xf32>
    %71 = vector.shape_cast %70 : vector<1x8x128xf32> to vector<8x128xf32>
    %72 = vector.shape_cast %68 : vector<8x128xf32> to vector<1x8x128xf32>
    tpu.vector_store %arg6[%69, %c0_31, %c0_32], %72 {strides = array<i32>} : memref<8x8x128xf32, #tpu.memory_space<vmem>>, vector<1x8x128xf32>,
    %73 = vector.extract_strided_slice %62 {offsets = [0, 0], sizes = [8, 128], strides = [1, 1]} : vector<8x256xf32> to vector<8x128xf32>
    %c3_i32 = arith.constant 3 : i32
    %74 = arith.index_cast %c3_i32 : i32 to index
    %c0_33 = arith.constant 0 : index
    %c0_34 = arith.constant 0 : index
    %75 = vector.load %arg1[%74, %c0_33, %c0_34] : memref<8x8x128xf32, #tpu.memory_space<vmem>>, vector<1x8x128xf32>
    %76 = vector.shape_cast %75 : vector<1x8x128xf32> to vector<8x128xf32>
    %77 = arith.addf %76, %73 : vector<8x128xf32>
    %78 = math.tanh %77 : vector<8x128xf32>
    %79 = arith.index_cast %c3_i32 : i32 to index
    %c0_35 = arith.constant 0 : index
    %c0_36 = arith.constant 0 : index
    %80 = vector.load %arg2[%79, %c0_35, %c0_36] : memref<8x8x128xf32, #tpu.memory_space<vmem>>, vector<1x8x128xf32>
    %81 = vector.shape_cast %80 : vector<1x8x128xf32> to vector<8x128xf32>
    %82 = arith.mulf %78, %81 : vector<8x128xf32>
    %83 = arith.truncf %82 : vector<8x128xf32> to vector<8x128xbf16>
    %cst_37 = arith.constant dense<0.000000e+00> : vector<8x256xf32>
    %84 = tpu.matmul %83, %0, %cst_37 {dimension_numbers = #tpu.dot_dimension_numbers<[1], [0], [0], [1], [0, 0, 1, 1], [], []>} : vector<8x128xbf16>, vector<128x256xbf16>, vector<8x256xf32> -> vector<8x256xf32>
    %85 = arith.index_cast %c3_i32 : i32 to index
    %c0_38 = arith.constant 0 : index
    %c0_39 = arith.constant 0 : index
    %86 = vector.load %arg7[%85, %c0_38, %c0_39] : memref<8x8x128xf32, #tpu.memory_space<vmem>>, vector<1x8x128xf32>
    %87 = vector.shape_cast %86 : vector<1x8x128xf32> to vector<8x128xf32>
    %88 = vector.shape_cast %82 : vector<8x128xf32> to vector<1x8x128xf32>
    tpu.vector_store %arg7[%85, %c0_38, %c0_39], %88 {strides = array<i32>} : memref<8x8x128xf32, #tpu.memory_space<vmem>>, vector<1x8x128xf32>,
    %89 = vector.extract_strided_slice %84 {offsets = [0, 128], sizes = [8, 128], strides = [1, 1]} : vector<8x256xf32> to vector<8x128xf32>
    %90 = arith.addf %89, %3 : vector<8x128xf32>
    %91 = arith.index_cast %c3_i32 : i32 to index
    %c0_40 = arith.constant 0 : index
    %c0_41 = arith.constant 0 : index
    %92 = vector.load %arg6[%91, %c0_40, %c0_41] : memref<8x8x128xf32, #tpu.memory_space<vmem>>, vector<1x8x128xf32>
    %93 = vector.shape_cast %92 : vector<1x8x128xf32> to vector<8x128xf32>
    %94 = vector.shape_cast %90 : vector<8x128xf32> to vector<1x8x128xf32>
    tpu.vector_store %arg6[%91, %c0_40, %c0_41], %94 {strides = array<i32>} : memref<8x8x128xf32, #tpu.memory_space<vmem>>, vector<1x8x128xf32>,
    %95 = vector.extract_strided_slice %84 {offsets = [0, 0], sizes = [8, 128], strides = [1, 1]} : vector<8x256xf32> to vector<8x128xf32>
    %c4_i32 = arith.constant 4 : i32
    %96 = arith.index_cast %c4_i32 : i32 to index
    %c0_42 = arith.constant 0 : index
    %c0_43 = arith.constant 0 : index
    %97 = vector.load %arg1[%96, %c0_42, %c0_43] : memref<8x8x128xf32, #tpu.memory_space<vmem>>, vector<1x8x128xf32>
    %98 = vector.shape_cast %97 : vector<1x8x128xf32> to vector<8x128xf32>
    %99 = arith.addf %98, %95 : vector<8x128xf32>
    %100 = math.tanh %99 : vector<8x128xf32>
    %101 = arith.index_cast %c4_i32 : i32 to index
    %c0_44 = arith.constant 0 : index
    %c0_45 = arith.constant 0 : index
    %102 = vector.load %arg2[%101, %c0_44, %c0_45] : memref<8x8x128xf32, #tpu.memory_space<vmem>>, vector<1x8x128xf32>
    %103 = vector.shape_cast %102 : vector<1x8x128xf32> to vector<8x128xf32>
    %104 = arith.mulf %100, %103 : vector<8x128xf32>
    %105 = arith.truncf %104 : vector<8x128xf32> to vector<8x128xbf16>
    %cst_46 = arith.constant dense<0.000000e+00> : vector<8x256xf32>
    %106 = tpu.matmul %105, %0, %cst_46 {dimension_numbers = #tpu.dot_dimension_numbers<[1], [0], [0], [1], [0, 0, 1, 1], [], []>} : vector<8x128xbf16>, vector<128x256xbf16>, vector<8x256xf32> -> vector<8x256xf32>
    %107 = arith.index_cast %c4_i32 : i32 to index
    %c0_47 = arith.constant 0 : index
    %c0_48 = arith.constant 0 : index
    %108 = vector.load %arg7[%107, %c0_47, %c0_48] : memref<8x8x128xf32, #tpu.memory_space<vmem>>, vector<1x8x128xf32>
    %109 = vector.shape_cast %108 : vector<1x8x128xf32> to vector<8x128xf32>
    %110 = vector.shape_cast %104 : vector<8x128xf32> to vector<1x8x128xf32>
    tpu.vector_store %arg7[%107, %c0_47, %c0_48], %110 {strides = array<i32>} : memref<8x8x128xf32, #tpu.memory_space<vmem>>, vector<1x8x128xf32>,
    %111 = vector.extract_strided_slice %106 {offsets = [0, 128], sizes = [8, 128], strides = [1, 1]} : vector<8x256xf32> to vector<8x128xf32>
    %112 = arith.addf %111, %3 : vector<8x128xf32>
    %113 = arith.index_cast %c4_i32 : i32 to index
    %c0_49 = arith.constant 0 : index
    %c0_50 = arith.constant 0 : index
    %114 = vector.load %arg6[%113, %c0_49, %c0_50] : memref<8x8x128xf32, #tpu.memory_space<vmem>>, vector<1x8x128xf32>
    %115 = vector.shape_cast %114 : vector<1x8x128xf32> to vector<8x128xf32>
    %116 = vector.shape_cast %112 : vector<8x128xf32> to vector<1x8x128xf32>
    tpu.vector_store %arg6[%113, %c0_49, %c0_50], %116 {strides = array<i32>} : memref<8x8x128xf32, #tpu.memory_space<vmem>>, vector<1x8x128xf32>,
    %117 = vector.extract_strided_slice %106 {offsets = [0, 0], sizes = [8, 128], strides = [1, 1]} : vector<8x256xf32> to vector<8x128xf32>
    %c5_i32 = arith.constant 5 : i32
    %118 = arith.index_cast %c5_i32 : i32 to index
    %c0_51 = arith.constant 0 : index
    %c0_52 = arith.constant 0 : index
    %119 = vector.load %arg1[%118, %c0_51, %c0_52] : memref<8x8x128xf32, #tpu.memory_space<vmem>>, vector<1x8x128xf32>
    %120 = vector.shape_cast %119 : vector<1x8x128xf32> to vector<8x128xf32>
    %121 = arith.addf %120, %117 : vector<8x128xf32>
    %122 = math.tanh %121 : vector<8x128xf32>
    %123 = arith.index_cast %c5_i32 : i32 to index
    %c0_53 = arith.constant 0 : index
    %c0_54 = arith.constant 0 : index
    %124 = vector.load %arg2[%123, %c0_53, %c0_54] : memref<8x8x128xf32, #tpu.memory_space<vmem>>, vector<1x8x128xf32>
    %125 = vector.shape_cast %124 : vector<1x8x128xf32> to vector<8x128xf32>
    %126 = arith.mulf %122, %125 : vector<8x128xf32>
    %127 = arith.truncf %126 : vector<8x128xf32> to vector<8x128xbf16>
    %cst_55 = arith.constant dense<0.000000e+00> : vector<8x256xf32>
    %128 = tpu.matmul %127, %0, %cst_55 {dimension_numbers = #tpu.dot_dimension_numbers<[1], [0], [0], [1], [0, 0, 1, 1], [], []>} : vector<8x128xbf16>, vector<128x256xbf16>, vector<8x256xf32> -> vector<8x256xf32>
    %129 = arith.index_cast %c5_i32 : i32 to index
    %c0_56 = arith.constant 0 : index
    %c0_57 = arith.constant 0 : index
    %130 = vector.load %arg7[%129, %c0_56, %c0_57] : memref<8x8x128xf32, #tpu.memory_space<vmem>>, vector<1x8x128xf32>
    %131 = vector.shape_cast %130 : vector<1x8x128xf32> to vector<8x128xf32>
    %132 = vector.shape_cast %126 : vector<8x128xf32> to vector<1x8x128xf32>
    tpu.vector_store %arg7[%129, %c0_56, %c0_57], %132 {strides = array<i32>} : memref<8x8x128xf32, #tpu.memory_space<vmem>>, vector<1x8x128xf32>,
    %133 = vector.extract_strided_slice %128 {offsets = [0, 128], sizes = [8, 128], strides = [1, 1]} : vector<8x256xf32> to vector<8x128xf32>
    %134 = arith.addf %133, %3 : vector<8x128xf32>
    %135 = arith.index_cast %c5_i32 : i32 to index
    %c0_58 = arith.constant 0 : index
    %c0_59 = arith.constant 0 : index
    %136 = vector.load %arg6[%135, %c0_58, %c0_59] : memref<8x8x128xf32, #tpu.memory_space<vmem>>, vector<1x8x128xf32>
    %137 = vector.shape_cast %136 : vector<1x8x128xf32> to vector<8x128xf32>
    %138 = vector.shape_cast %134 : vector<8x128xf32> to vector<1x8x128xf32>
    tpu.vector_store %arg6[%135, %c0_58, %c0_59], %138 {strides = array<i32>} : memref<8x8x128xf32, #tpu.memory_space<vmem>>, vector<1x8x128xf32>,
    %139 = vector.extract_strided_slice %128 {offsets = [0, 0], sizes = [8, 128], strides = [1, 1]} : vector<8x256xf32> to vector<8x128xf32>
    %c6_i32 = arith.constant 6 : i32
    %140 = arith.index_cast %c6_i32 : i32 to index
    %c0_60 = arith.constant 0 : index
    %c0_61 = arith.constant 0 : index
    %141 = vector.load %arg1[%140, %c0_60, %c0_61] : memref<8x8x128xf32, #tpu.memory_space<vmem>>, vector<1x8x128xf32>
    %142 = vector.shape_cast %141 : vector<1x8x128xf32> to vector<8x128xf32>
    %143 = arith.addf %142, %139 : vector<8x128xf32>
    %144 = math.tanh %143 : vector<8x128xf32>
    %145 = arith.index_cast %c6_i32 : i32 to index
    %c0_62 = arith.constant 0 : index
    %c0_63 = arith.constant 0 : index
    %146 = vector.load %arg2[%145, %c0_62, %c0_63] : memref<8x8x128xf32, #tpu.memory_space<vmem>>, vector<1x8x128xf32>
    %147 = vector.shape_cast %146 : vector<1x8x128xf32> to vector<8x128xf32>
    %148 = arith.mulf %144, %147 : vector<8x128xf32>
    %149 = arith.truncf %148 : vector<8x128xf32> to vector<8x128xbf16>
    %cst_64 = arith.constant dense<0.000000e+00> : vector<8x256xf32>
    %150 = tpu.matmul %149, %0, %cst_64 {dimension_numbers = #tpu.dot_dimension_numbers<[1], [0], [0], [1], [0, 0, 1, 1], [], []>} : vector<8x128xbf16>, vector<128x256xbf16>, vector<8x256xf32> -> vector<8x256xf32>
    %151 = arith.index_cast %c6_i32 : i32 to index
    %c0_65 = arith.constant 0 : index
    %c0_66 = arith.constant 0 : index
    %152 = vector.load %arg7[%151, %c0_65, %c0_66] : memref<8x8x128xf32, #tpu.memory_space<vmem>>, vector<1x8x128xf32>
    %153 = vector.shape_cast %152 : vector<1x8x128xf32> to vector<8x128xf32>
    %154 = vector.shape_cast %148 : vector<8x128xf32> to vector<1x8x128xf32>
    tpu.vector_store %arg7[%151, %c0_65, %c0_66], %154 {strides = array<i32>} : memref<8x8x128xf32, #tpu.memory_space<vmem>>, vector<1x8x128xf32>,
    %155 = vector.extract_strided_slice %150 {offsets = [0, 128], sizes = [8, 128], strides = [1, 1]} : vector<8x256xf32> to vector<8x128xf32>
    %156 = arith.addf %155, %3 : vector<8x128xf32>
    %157 = arith.index_cast %c6_i32 : i32 to index
    %c0_67 = arith.constant 0 : index
    %c0_68 = arith.constant 0 : index
    %158 = vector.load %arg6[%157, %c0_67, %c0_68] : memref<8x8x128xf32, #tpu.memory_space<vmem>>, vector<1x8x128xf32>
    %159 = vector.shape_cast %158 : vector<1x8x128xf32> to vector<8x128xf32>
    %160 = vector.shape_cast %156 : vector<8x128xf32> to vector<1x8x128xf32>
    tpu.vector_store %arg6[%157, %c0_67, %c0_68], %160 {strides = array<i32>} : memref<8x8x128xf32, #tpu.memory_space<vmem>>, vector<1x8x128xf32>,
    %161 = vector.extract_strided_slice %150 {offsets = [0, 0], sizes = [8, 128], strides = [1, 1]} : vector<8x256xf32> to vector<8x128xf32>
    %c7_i32 = arith.constant 7 : i32
    %162 = arith.index_cast %c7_i32 : i32 to index
    %c0_69 = arith.constant 0 : index
    %c0_70 = arith.constant 0 : index
    %163 = vector.load %arg1[%162, %c0_69, %c0_70] : memref<8x8x128xf32, #tpu.memory_space<vmem>>, vector<1x8x128xf32>
    %164 = vector.shape_cast %163 : vector<1x8x128xf32> to vector<8x128xf32>
    %165 = arith.addf %164, %161 : vector<8x128xf32>
    %166 = math.tanh %165 : vector<8x128xf32>
    %167 = arith.index_cast %c7_i32 : i32 to index
    %c0_71 = arith.constant 0 : index
    %c0_72 = arith.constant 0 : index
    %168 = vector.load %arg2[%167, %c0_71, %c0_72] : memref<8x8x128xf32, #tpu.memory_space<vmem>>, vector<1x8x128xf32>
    %169 = vector.shape_cast %168 : vector<1x8x128xf32> to vector<8x128xf32>
    %170 = arith.mulf %166, %169 : vector<8x128xf32>
    %171 = arith.truncf %170 : vector<8x128xf32> to vector<8x128xbf16>
    %cst_73 = arith.constant dense<0.000000e+00> : vector<8x256xf32>
    %172 = tpu.matmul %171, %0, %cst_73 {dimension_numbers = #tpu.dot_dimension_numbers<[1], [0], [0], [1], [0, 0, 1, 1], [], []>} : vector<8x128xbf16>, vector<128x256xbf16>, vector<8x256xf32> -> vector<8x256xf32>
    %173 = arith.index_cast %c7_i32 : i32 to index
    %c0_74 = arith.constant 0 : index
    %c0_75 = arith.constant 0 : index
    %174 = vector.load %arg7[%173, %c0_74, %c0_75] : memref<8x8x128xf32, #tpu.memory_space<vmem>>, vector<1x8x128xf32>
    %175 = vector.shape_cast %174 : vector<1x8x128xf32> to vector<8x128xf32>
    %176 = vector.shape_cast %170 : vector<8x128xf32> to vector<1x8x128xf32>
    tpu.vector_store %arg7[%173, %c0_74, %c0_75], %176 {strides = array<i32>} : memref<8x8x128xf32, #tpu.memory_space<vmem>>, vector<1x8x128xf32>,
    %177 = vector.extract_strided_slice %172 {offsets = [0, 128], sizes = [8, 128], strides = [1, 1]} : vector<8x256xf32> to vector<8x128xf32>
    %178 = arith.addf %177, %3 : vector<8x128xf32>
    %179 = arith.index_cast %c7_i32 : i32 to index
    %c0_76 = arith.constant 0 : index
    %c0_77 = arith.constant 0 : index
    %180 = vector.load %arg6[%179, %c0_76, %c0_77] : memref<8x8x128xf32, #tpu.memory_space<vmem>>, vector<1x8x128xf32>
    %181 = vector.shape_cast %180 : vector<1x8x128xf32> to vector<8x128xf32>
    %182 = vector.shape_cast %178 : vector<8x128xf32> to vector<1x8x128xf32>
    tpu.vector_store %arg6[%179, %c0_76, %c0_77], %182 {strides = array<i32>} : memref<8x8x128xf32, #tpu.memory_space<vmem>>, vector<1x8x128xf32>,
    %183 = vector.extract_strided_slice %172 {offsets = [0, 0], sizes = [8, 128], strides = [1, 1]} : vector<8x256xf32> to vector<8x128xf32>
    %c8_i32 = arith.constant 8 : i32
    %c0_78 = arith.constant 0 : index
    %c0_79 = arith.constant 0 : index
    %184 = vector.load %arg8[%c0_78, %c0_79] : memref<8x128xf32, #tpu.memory_space<vmem>>, vector<8x128xf32>
    tpu.vector_store %arg8[%c0_78, %c0_79], %183 {strides = array<i32>} : memref<8x128xf32, #tpu.memory_space<vmem>>, vector<8x128xf32>,
    return
  }
  func.func @transform_0(%arg0: i32) -> (i32, i32, i32) {
    %c0_i32 = arith.constant 0 : i32
    %c0_i32_0 = arith.constant 0 : i32
    %c0_i32_1 = arith.constant 0 : i32
    return %arg0, %c0_i32, %c0_i32_0 : i32, i32, i32
  }
  func.func @transform_1(%arg0: i32) -> (i32, i32, i32) {
    %c0_i32 = arith.constant 0 : i32
    %c0_i32_0 = arith.constant 0 : i32
    %c0_i32_1 = arith.constant 0 : i32
    return %arg0, %c0_i32, %c0_i32_0 : i32, i32, i32
  }
  func.func @transform_2(%arg0: i32) -> (i32, i32) {
    %c0_i32 = arith.constant 0 : i32
    %c0_i32_0 = arith.constant 0 : i32
    %c0_i32_1 = arith.constant 0 : i32
    return %c0_i32, %c0_i32_0 : i32, i32
  }
  func.func @transform_3(%arg0: i32) -> (i32, i32) {
    %c0_i32 = arith.constant 0 : i32
    %c0_i32_0 = arith.constant 0 : i32
    %c0_i32_1 = arith.constant 0 : i32
    return %c0_i32, %c0_i32_0 : i32, i32
  }
  func.func @transform_4(%arg0: i32) -> (i32, i32) {
    %c0_i32 = arith.constant 0 : i32
    %c0_i32_0 = arith.constant 0 : i32
    %c0_i32_1 = arith.constant 0 : i32
    return %c0_i32, %c0_i32_0 : i32, i32
  }
  func.func @transform_5(%arg0: i32) -> (i32, i32, i32) {
    %c0_i32 = arith.constant 0 : i32
    %c0_i32_0 = arith.constant 0 : i32
    %c0_i32_1 = arith.constant 0 : i32
    return %arg0, %c0_i32, %c0_i32_0 : i32, i32, i32
  }
  func.func @transform_6(%arg0: i32) -> (i32, i32, i32) {
    %c0_i32 = arith.constant 0 : i32
    %c0_i32_0 = arith.constant 0 : i32
    %c0_i32_1 = arith.constant 0 : i32
    return %arg0, %c0_i32, %c0_i32_0 : i32, i32, i32
  }
}

</mosaic_0001>

<llo_original>
// kernel: rnn_forward_seq.1
$region0: #{rnn_forward_seq.1}
  #allocation0 [shape = 'u32[]', space=smem, size = 0x4, offset = 0x4, fixed_abs, tag = 'smem constant byte address 0x4 - core index']
  #allocation1 [shape = 'u32[72,128]{1,0:T(1,128)}', space=vmem, size = 0x9000, scoped, tag = 'internal scratch']
  #allocation2 [shape = 'f32[8,128]{1,0:T(8,128)}', space=vmem, size = 0x1000, scoped, tag = 'scratch operand']
  %s0 = inlined_call_operand.vmem [shape: f32[16,8,128], index: 0, kind: input, shape index: {}]
  %s1 = inlined_call_operand.vmem [shape: f32[16,8,128], index: 1, kind: input, shape index: {}]
  %s2 = inlined_call_operand.vmem [shape: f32[8,128], index: 2, kind: input, shape index: {}]
  %s3 = inlined_call_operand.vmem [shape: bf16[128,256], index: 3, kind: input, shape index: {}]
  %s4 = inlined_call_operand.vmem [shape: f32[1,128], index: 4, kind: input, shape index: {}]
  %s5 = inlined_call_operand.hbm [shape: f32[16,8,128], index: 5, kind: output, shape index: {0}]
  %s6 = inlined_call_operand.hbm [shape: f32[16,8,128], index: 6, kind: output, shape index: {1}]
  %7 = xla_tuple %s5, %s6
  %s8 = sld [smem:[#allocation0]]
  $region65: #{rnn_forward_seq.1} parent=0
    _
  %s10 = ssub.s32 1, %s8
  %s11 = scalar_select 0, %s10, %s8
  $region1: #{rnn_forward_seq.1} parent=0
    #allocation3 [shape = 'u8[65536]{0}', space=vmem, size = 0x10000, scoped, tag = 'output window, operand 0']
    #allocation4 [shape = 's32[2]{0}', space=sflag, size = 0x8, scoped, tag = 'scoped memory for rnn_forward_seq.1']
    #allocation5 [shape = 'u8[65536]{0}', space=vmem, size = 0x10000, scoped, tag = 'output window, operand 1']
    #allocation6 [shape = 's32[2]{0}', space=sflag, size = 0x8, scoped, tag = 'scoped memory for rnn_forward_seq.1']
    %12 = vsyncpa [#allocation4], 0
    %s13 = scalar_lea.sflag [#allocation4], 1
    %14 = vsyncpa %s13, 0
    %15 = vsyncpa [#allocation6], 0
    %s16 = scalar_lea.sflag [#allocation6], 1
    %17 = vsyncpa %s16, 0
    loop: start=0, step=1, limit=4
    $region2: #{rnn_forward_seq.1} parent=1 // loop_pre_header
      _
    $region3: #{rnn_forward_seq.1} parent=1 // loop_header
      %s19 = sphi 0, %s23
      %p20 = scmp.ge.s32.totalorder %s19, 4
      %s29 = sphi 0, %s31
      %s32 = sphi 0, %s29
      %s33 = sphi 0, %s32
      %s49 = sphi 0, %s33
      %s55 = sphi 0, %s57
      %s58 = sphi 0, %s55
      %s59 = sphi 0, %s58
      %s75 = sphi 0, %s59
      %s79 = sphi 0, %s79
      %s81 = sphi 0, %s79
      %s82 = sphi 0, %s81
      %s96 = sphi 0, %s82
      %s100 = sphi 0, %s100
      %s102 = sphi 0, %s100
      %s103 = sphi 0, %s102
      %s117 = sphi 0, %s103
      %s121 = sphi 0, %s121
      %s123 = sphi 0, %s121
      %s124 = sphi 0, %s123
      %s138 = sphi 0, %s124
      %s144 = sphi 0, %s146
      %s147 = sphi 0, %s144
      %s148 = sphi 0, %s147
      %s164 = sphi 0, %s148
      %s170 = sphi 0, %s172
      %s173 = sphi 0, %s170
      %s174 = sphi 0, %s173
      %s190 = sphi 0, %s174
    $region4: #{rnn_forward_seq.1} parent=1 // loop_header_branch
      %22 = sbr.rel (%p20) target = $region8
    $region5: #{rnn_forward_seq.1} parent=1 // loop_body
      %s24 = ssub.s32 %s19, 1
      %s25 = ssub.s32 %s19, 2
      %s26 = sadd.s32 %s19, 1
      %s27 = ssub.s32 %s19, %s26
      %p28 = scmp.eq.s32.totalorder %s27, 0
      %s30 = sadd.s32 %s29, 1
      %s31 = scalar_select %p28, %s29, %s30
      %p34 = pneg %p28
      %p35 = scmp.eq.s32.totalorder %s19, 1
      %p36 = por %p34, %p35
      %p37 = scmp.ne.s32.totalorder %s29, %s32
      %p38 = scmp.eq.s32.totalorder %s19, 0
      %p39 = por %p37, %p38
      %p40 = scmp.ne.s32.totalorder %s29, %s32
      %p41 = scmp.eq.s32.totalorder %s24, 1
      %p42 = por %p40, %p41
      %p43 = scmp.ne.s32.totalorder %s32, %s33
      %p44 = scmp.eq.s32.totalorder %s24, 0
      %p45 = por %p43, %p44
      %p46 = scmp.ne.s32.totalorder %s32, %s33
      %p47 = scmp.eq.s32.totalorder %s25, 1
      %p48 = por %p46, %p47
      %p50 = scmp.ne.s32.totalorder %s33, %s49
      %p51 = scmp.eq.s32.totalorder %s25, 0
      %p52 = por %p50, %p51
      %s53 = ssub.s32 %s19, %s26
      %p54 = scmp.eq.s32.totalorder %s53, 0
      %s56 = sadd.s32 %s55, 1
      %s57 = scalar_select %p54, %s55, %s56
      %p60 = pneg %p54
      %p61 = scmp.eq.s32.totalorder %s19, 1
      %p62 = por %p60, %p61
      %p63 = scmp.ne.s32.totalorder %s55, %s58
      %p64 = scmp.eq.s32.totalorder %s19, 0
      %p65 = por %p63, %p64
      %p66 = scmp.ne.s32.totalorder %s55, %s58
      %p67 = scmp.eq.s32.totalorder %s24, 1
      %p68 = por %p66, %p67
      %p69 = scmp.ne.s32.totalorder %s58, %s59
      %p70 = scmp.eq.s32.totalorder %s24, 0
      %p71 = por %p69, %p70
      %p72 = scmp.ne.s32.totalorder %s58, %s59
      %p73 = scmp.eq.s32.totalorder %s25, 1
      %p74 = por %p72, %p73
      %p76 = scmp.ne.s32.totalorder %s59, %s75
      %p77 = scmp.eq.s32.totalorder %s25, 0
      %p78 = por %p76, %p77
      %s80 = sadd.s32 %s79, 1
      %p83 = scmp.eq.s32.totalorder %s19, 1
      %p84 = scmp.ne.s32.totalorder %s79, %s81
      %p85 = scmp.eq.s32.totalorder %s19, 0
      %p86 = por %p84, %p85
      %p87 = scmp.ne.s32.totalorder %s79, %s81
      %p88 = scmp.eq.s32.totalorder %s24, 1
      %p89 = por %p87, %p88
      %p90 = scmp.ne.s32.totalorder %s81, %s82
      %p91 = scmp.eq.s32.totalorder %s24, 0
      %p92 = por %p90, %p91
      %p93 = scmp.ne.s32.totalorder %s81, %s82
      %p94 = scmp.eq.s32.totalorder %s25, 1
      %p95 = por %p93, %p94
      %p97 = scmp.ne.s32.totalorder %s82, %s96
      %p98 = scmp.eq.s32.totalorder %s25, 0
      %p99 = por %p97, %p98
      %s101 = sadd.s32 %s100, 1
      %p104 = scmp.eq.s32.totalorder %s19, 1
      %p105 = scmp.ne.s32.totalorder %s100, %s102
      %p106 = scmp.eq.s32.totalorder %s19, 0
      %p107 = por %p105, %p106
      %p108 = scmp.ne.s32.totalorder %s100, %s102
      %p109 = scmp.eq.s32.totalorder %s24, 1
      %p110 = por %p108, %p109
      %p111 = scmp.ne.s32.totalorder %s102, %s103
      %p112 = scmp.eq.s32.totalorder %s24, 0
      %p113 = por %p111, %p112
      %p114 = scmp.ne.s32.totalorder %s102, %s103
      %p115 = scmp.eq.s32.totalorder %s25, 1
      %p116 = por %p114, %p115
      %p118 = scmp.ne.s32.totalorder %s103, %s117
      %p119 = scmp.eq.s32.totalorder %s25, 0
      %p120 = por %p118, %p119
      %s122 = sadd.s32 %s121, 1
      %p125 = scmp.eq.s32.totalorder %s19, 1
      %p126 = scmp.ne.s32.totalorder %s121, %s123
      %p127 = scmp.eq.s32.totalorder %s19, 0
      %p128 = por %p126, %p127
      %p129 = scmp.ne.s32.totalorder %s121, %s123
      %p130 = scmp.eq.s32.totalorder %s24, 1
      %p131 = por %p129, %p130
      %p132 = scmp.ne.s32.totalorder %s123, %s124
      %p133 = scmp.eq.s32.totalorder %s24, 0
      %p134 = por %p132, %p133
      %p135 = scmp.ne.s32.totalorder %s123, %s124
      %p136 = scmp.eq.s32.totalorder %s25, 1
      %p137 = por %p135, %p136
      %p139 = scmp.ne.s32.totalorder %s124, %s138
      %p140 = scmp.eq.s32.totalorder %s25, 0
      %p141 = por %p139, %p140
      %s142 = ssub.s32 %s19, %s26
      %p143 = scmp.eq.s32.totalorder %s142, 0
      %s145 = sadd.s32 %s144, 1
      %s146 = scalar_select %p143, %s144, %s145
      %p149 = pneg %p143
      %p150 = scmp.eq.s32.totalorder %s19, 1
      %p151 = por %p149, %p150
      %p152 = scmp.ne.s32.totalorder %s144, %s147
      %p153 = scmp.eq.s32.totalorder %s19, 0
      %p154 = por %p152, %p153
      %p155 = scmp.ne.s32.totalorder %s144, %s147
      %p156 = scmp.eq.s32.totalorder %s24, 1
      %p157 = por %p155, %p156
      %p158 = scmp.ne.s32.totalorder %s147, %s148
      %p159 = scmp.eq.s32.totalorder %s24, 0
      %p160 = por %p158, %p159
      %p161 = scmp.ne.s32.totalorder %s147, %s148
      %p162 = scmp.eq.s32.totalorder %s25, 1
      %p163 = por %p161, %p162
      %p165 = scmp.ne.s32.totalorder %s148, %s164
      %p166 = scmp.eq.s32.totalorder %s25, 0
      %p167 = por %p165, %p166
      %s168 = ssub.s32 %s19, %s26
      %p169 = scmp.eq.s32.totalorder %s168, 0
      %s171 = sadd.s32 %s170, 1
      %s172 = scalar_select %p169, %s170, %s171
      %p175 = pneg %p169
      %p176 = scmp.eq.s32.totalorder %s19, 1
      %p177 = por %p175, %p176
      %p178 = scmp.ne.s32.totalorder %s170, %s173
      %p179 = scmp.eq.s32.totalorder %s19, 0
      %p180 = por %p178, %p179
      %p181 = scmp.ne.s32.totalorder %s170, %s173
      %p182 = scmp.eq.s32.totalorder %s24, 1
      %p183 = por %p181, %p182
      %p184 = scmp.ne.s32.totalorder %s173, %s174
      %p185 = scmp.eq.s32.totalorder %s24, 0
      %p186 = por %p184, %p185
      %p187 = scmp.ne.s32.totalorder %s173, %s174
      %p188 = scmp.eq.s32.totalorder %s25, 1
      %p189 = por %p187, %p188
      %p191 = scmp.ne.s32.totalorder %s174, %s190
      %p192 = scmp.eq.s32.totalorder %s25, 0
      %p193 = por %p191, %p192
      %p194 = scmp.le.s32.totalorder 1, %s19
      %p195 = scmp.lt.s32.totalorder %s19, 3
      %p196 = pnand %p194, %p195
      %p197 = pneg %p196
      // Predicated region
      $region9: #{rnn_forward_seq.1} parent=5 // pred_check
        _
      $region10: #{rnn_forward_seq.1} parent=5 // pred_check_branch
        %199 = sbr.rel (%p196) target = $region12
      $region11: #{rnn_forward_seq.1} parent=5 // pred_region
        %s200 = ssub.s32 %s19, 1
        // Predicated region
        $region13: #{rnn_forward_seq.1} parent=11 // pred_check
          %p201 = pneg %p92
        $region14: #{rnn_forward_seq.1} parent=11 // pred_check_branch
          %203 = sbr.rel (%p201) target = $region16
        $region15: #{rnn_forward_seq.1} parent=11 // pred_region
          _
        $region16: #{rnn_forward_seq.1} parent=11 // pred_fallthru
          _
        // Predicated region
        $region17: #{rnn_forward_seq.1} parent=11 // pred_check
          %p204 = pneg %p113
        $region18: #{rnn_forward_seq.1} parent=11 // pred_check_branch
          %206 = sbr.rel (%p204) target = $region20
        $region19: #{rnn_forward_seq.1} parent=11 // pred_region
          _
        $region20: #{rnn_forward_seq.1} parent=11 // pred_fallthru
          _
        // Predicated region
        $region21: #{rnn_forward_seq.1} parent=11 // pred_check
          %p207 = pneg %p134
        $region22: #{rnn_forward_seq.1} parent=11 // pred_check_branch
          %209 = sbr.rel (%p207) target = $region24
        $region23: #{rnn_forward_seq.1} parent=11 // pred_region
          _
        $region24: #{rnn_forward_seq.1} parent=11 // pred_fallthru
          _
      $region12: #{rnn_forward_seq.1} parent=5 // pred_fallthru
        _
      %p210 = scmp.lt.s32.totalorder %s19, 2
      // Predicated region
      $region25: #{rnn_forward_seq.1} parent=5 // pred_check
        %p211 = pneg %p210
      $region26: #{rnn_forward_seq.1} parent=5 // pred_check_branch
        %213 = sbr.rel (%p211) target = $region28
      $region27: #{rnn_forward_seq.1} parent=5 // pred_region
        // Predicated region
        $region29: #{rnn_forward_seq.1} parent=27 // pred_check
          %p214 = pneg %p39
        $region30: #{rnn_forward_seq.1} parent=27 // pred_check_branch
          %216 = sbr.rel (%p214) target = $region32
        $region31: #{rnn_forward_seq.1} parent=27 // pred_region
          %s217 = smul.u32 8, %s19
          %p218 = scmp.lt.s32.totalorder %s217, 15
          %s219 = scalar_select %p218, %s217, 15
          %s220 = smul.addr %s219, 8
          %s221 = scalar_lea.vmem %s0, %s220
          %s222 = smul.u32 8, %s19
        $region32: #{rnn_forward_seq.1} parent=27 // pred_fallthru
          _
        // Predicated region
        $region33: #{rnn_forward_seq.1} parent=27 // pred_check
          %p223 = pneg %p65
        $region34: #{rnn_forward_seq.1} parent=27 // pred_check_branch
          %225 = sbr.rel (%p223) target = $region36
        $region35: #{rnn_forward_seq.1} parent=27 // pred_region
          %s226 = smul.u32 8, %s19
          %p227 = scmp.lt.s32.totalorder %s226, 15
          %s228 = scalar_select %p227, %s226, 15
          %s229 = smul.addr %s228, 8
          %s230 = scalar_lea.vmem %s1, %s229
          %s231 = smul.u32 8, %s19
        $region36: #{rnn_forward_seq.1} parent=27 // pred_fallthru
          _
      $region28: #{rnn_forward_seq.1} parent=5 // pred_fallthru
        _
      %p232 = scmp.le.s32.totalorder 1, %s19
      %p233 = scmp.lt.s32.totalorder %s19, 3
      %p234 = pnand %p232, %p233
      %p235 = pneg %p234
      // Predicated region
      $region37: #{rnn_forward_seq.1} parent=5 // pred_check
        _
      $region38: #{rnn_forward_seq.1} parent=5 // pred_check_branch
        %237 = sbr.rel (%p234) target = $region40
      $region39: #{rnn_forward_seq.1} parent=5 // pred_region
        %s238 = ssub.s32 %s19, 1
        %s239 = smul.u32 8, %s24
        %p240 = scmp.lt.s32.totalorder %s239, 15
        %s241 = scalar_select %p240, %s239, 15
        %s242 = smul.addr %s241, 8
        %s243 = scalar_lea.vmem %s0, %s242
        %p244 = pneg %p45
        %p245 = pneg %p42
        %s246 = smul.u32 8, %s24
        %p247 = scmp.lt.s32.totalorder %s246, 15
        %s248 = scalar_select %p247, %s246, 15
        %s249 = smul.addr %s248, 8
        %s250 = scalar_lea.vmem %s1, %s249
        %p251 = pneg %p71
        %p252 = pneg %p68
        %p253 = pneg %p92
        %p254 = pneg %p89
        %p255 = pneg %p113
        %p256 = pneg %p110
        %p257 = pneg %p134
        %p258 = pneg %p131
        %p259 = pneg %p160
        %p260 = pneg %p157
        %s261 = sand.u32 %s147, 1
        %s262 = scalar_lea.sflag [#allocation4], %s261
        %s263 = sand.u32 %s147, 1
        %s264 = smul.addr %s263, 64
        %s265 = scalar_lea.vmem [#allocation3], %s264
        %p266 = pneg %p186
        %p267 = pneg %p183
        %s268 = sand.u32 %s173, 1
        %s269 = scalar_lea.sflag [#allocation6], %s268
        %s270 = sand.u32 %s173, 1
        %s271 = smul.addr %s270, 64
        %s272 = scalar_lea.vmem [#allocation5], %s271
        %s273 = smul.u32 8, %s24
        %p274 = scmp.lt.s32.totalorder %s273, 15
        %s275 = scalar_select %p274, %s273, 15
        %s276 = smul.addr %s275, 8
        %s277 = scalar_lea.vmem %s0, %s276
        %s278 = smul.u32 8, %s24
        %s279 = smul.u32 8, %s24
        %p280 = scmp.lt.s32.totalorder %s279, 15
        %s281 = scalar_select %p280, %s279, 15
        %s282 = smul.addr %s281, 8
        %s283 = scalar_lea.vmem %s1, %s282
        %s284 = smul.u32 8, %s24
        %s285 = smul.u32 8, %s24
        %s286 = smul.u32 8, %s24
        %v287 = vld [vmem:[%s3] sm:$0xff]
        %v288 = vld [vmem:[%s3 + $0x8] sm:$0xff]
        %v289 = vld [vmem:[%s3 + $0x10] sm:$0xff]
        %v290 = vld [vmem:[%s3 + $0x18] sm:$0xff]
        %v291 = vld [vmem:[%s3 + $0x20] sm:$0xff]
        %v292 = vld [vmem:[%s3 + $0x28] sm:$0xff]
        %v293 = vld [vmem:[%s3 + $0x30] sm:$0xff]
        %v294 = vld [vmem:[%s3 + $0x38] sm:$0xff]
        %v295 = vld [vmem:[%s3 + $0x40] sm:$0xff]
        %v296 = vld [vmem:[%s3 + $0x48] sm:$0xff]
        %v297 = vld [vmem:[%s3 + $0x50] sm:$0xff]
        %v298 = vld [vmem:[%s3 + $0x58] sm:$0xff]
        %v299 = vld [vmem:[%s3 + $0x60] sm:$0xff]
        %v300 = vld [vmem:[%s3 + $0x68] sm:$0xff]
        %v301 = vld [vmem:[%s3 + $0x70] sm:$0xff]
        %v302 = vld [vmem:[%s3 + $0x78] sm:$0xff]
        %v303 = vld [vmem:[%s4] sm:$0x1]
        %v305 = vperm.slane %v303, 0
        %p307 = scmp.eq.s32.totalorder %s24, 0
        // Predicated region
        $region41: #{rnn_forward_seq.1} parent=39 // pred_check
          %p308 = pneg %p307
        $region42: #{rnn_forward_seq.1} parent=39 // pred_check_branch
          %310 = sbr.rel (%p308) target = $region44
        $region43: #{rnn_forward_seq.1} parent=39 // pred_region
          %v311 = vld [vmem:[%s2] sm:$0xff]
          %v312 = vpack.c.bf16 %v311, %v311
          %v329 = vunpack.c.l.b16 %v287
          %v330 = vunpack.c.l.b16 %v288
          %v331 = vunpack.c.l.b16 %v289
          %v332 = vunpack.c.l.b16 %v290
          %v333 = vunpack.c.l.b16 %v291
          %v334 = vunpack.c.l.b16 %v292
          %v335 = vunpack.c.l.b16 %v293
          %v336 = vunpack.c.l.b16 %v294
          %v337 = vunpack.c.l.b16 %v295
          %v338 = vunpack.c.l.b16 %v296
          %v339 = vunpack.c.l.b16 %v297
          %v340 = vunpack.c.l.b16 %v298
          %v341 = vunpack.c.l.b16 %v299
          %v342 = vunpack.c.l.b16 %v300
          %v343 = vunpack.c.l.b16 %v301
          %v344 = vunpack.c.l.b16 %v302
          %v345 = vpack.c.b16 %v330, %v329
          %v346 = vpack.c.b16 %v332, %v331
          %v347 = vpack.c.b16 %v334, %v333
          %v348 = vpack.c.b16 %v336, %v335
          %v349 = vpack.c.b16 %v338, %v337
          %v350 = vpack.c.b16 %v340, %v339
          %v351 = vpack.c.b16 %v342, %v341
          %v352 = vpack.c.b16 %v344, %v343
          %361 = vmatpush.bf16.msra.mxu0 %v352
          %362 = vmatpush.bf16.msra.mxu0 %v351
          %363 = vmatpush.bf16.msra.mxu0 %v350
          %364 = vmatpush.bf16.msra.mxu0 %v349
          %365 = vmatpush.bf16.msra.mxu0 %v348
          %366 = vmatpush.bf16.msra.mxu0 %v347
          %367 = vmatpush.bf16.msra.mxu0 %v346
          %368 = vmatpush.bf16.msra.mxu0 %v345
          %369 = vmatmul.bf16.gmra.mxu0 %v312
          %v370 = vpop.f32.mrf.mxu0
          %v371 = vadd.f32 0.0, %v370
          %v372 = vpop.f32.mrf.mxu0
          %373 = vdwg.mxu0
          %374 = vst [vmem:[#allocation2] sm:$0xff] %v371
        $region44: #{rnn_forward_seq.1} parent=39 // pred_fallthru
          _
        %v375 = vld [vmem:[#allocation2] sm:$0xff]
        %v376 = vld [vmem:[%s277] sm:$0xff]
        %v377 = vadd.f32 %v376, %v375
        %v378 = vtanh.pop %v377
        %v379 = vld [vmem:[%s283] sm:$0xff]
        %v380 = vmul.f32 %v378, %v379
        %v381 = vpack.c.bf16 %v380, %v380
        %v398 = vunpack.c.l.b16 %v287
        %v399 = vunpack.c.h.b16 %v287
        %v400 = vunpack.c.l.b16 %v288
        %v401 = vunpack.c.h.b16 %v288
        %v402 = vunpack.c.l.b16 %v289
        %v403 = vunpack.c.h.b16 %v289
        %v404 = vunpack.c.l.b16 %v290
        %v405 = vunpack.c.h.b16 %v290
        %v406 = vunpack.c.l.b16 %v291
        %v407 = vunpack.c.h.b16 %v291
        %v408 = vunpack.c.l.b16 %v292
        %v409 = vunpack.c.h.b16 %v292
        %v410 = vunpack.c.l.b16 %v293
        %v411 = vunpack.c.h.b16 %v293
        %v412 = vunpack.c.l.b16 %v294
        %v413 = vunpack.c.h.b16 %v294
        %v414 = vunpack.c.l.b16 %v295
        %v415 = vunpack.c.h.b16 %v295
        %v416 = vunpack.c.l.b16 %v296
        %v417 = vunpack.c.h.b16 %v296
        %v418 = vunpack.c.l.b16 %v297
        %v419 = vunpack.c.h.b16 %v297
        %v420 = vunpack.c.l.b16 %v298
        %v421 = vunpack.c.h.b16 %v298
        %v422 = vunpack.c.l.b16 %v299
        %v423 = vunpack.c.h.b16 %v299
        %v424 = vunpack.c.l.b16 %v300
        %v425 = vunpack.c.h.b16 %v300
        %v426 = vunpack.c.l.b16 %v301
        %v427 = vunpack.c.h.b16 %v301
        %v428 = vunpack.c.l.b16 %v302
        %v429 = vunpack.c.h.b16 %v302
        %v430 = vpack.c.b16 %v400, %v398
        %v431 = vpack.c.b16 %v401, %v399
        %v432 = vpack.c.b16 %v404, %v402
        %v433 = vpack.c.b16 %v405, %v403
        %v434 = vpack.c.b16 %v408, %v406
        %v435 = vpack.c.b16 %v409, %v407
        %v436 = vpack.c.b16 %v412, %v410
        %v437 = vpack.c.b16 %v413, %v411
        %v438 = vpack.c.b16 %v416, %v414
        %v439 = vpack.c.b16 %v417, %v415
        %v440 = vpack.c.b16 %v420, %v418
        %v441 = vpack.c.b16 %v421, %v419
        %v442 = vpack.c.b16 %v424, %v422
        %v443 = vpack.c.b16 %v425, %v423
        %v444 = vpack.c.b16 %v428, %v426
        %v445 = vpack.c.b16 %v429, %v427
        %462 = vmatpush.bf16.msra.mxu0 %v444
        %463 = vmatpush.bf16.msra.mxu0 %v442
        %464 = vmatpush.bf16.msra.mxu0 %v440
        %465 = vmatpush.bf16.msra.mxu0 %v438
        %466 = vmatpush.bf16.msra.mxu0 %v436
        %467 = vmatpush.bf16.msra.mxu0 %v434
        %468 = vmatpush.bf16.msra.mxu0 %v432
        %469 = vmatpush.bf16.msra.mxu0 %v430
        %470 = vmatmul.bf16.gmra.mxu0 %v381
        %v471 = vpop.f32.mrf.mxu0
        %v472 = vadd.f32 0.0, %v471
        %v473 = vpop.f32.mrf.mxu0
        %474 = vdwg.mxu0
        %475 = vmatpush.bf16.msra.mxu0 %v445
        %476 = vmatpush.bf16.msra.mxu0 %v443
        %477 = vmatpush.bf16.msra.mxu0 %v441
        %478 = vmatpush.bf16.msra.mxu0 %v439
        %479 = vmatpush.bf16.msra.mxu0 %v437
        %480 = vmatpush.bf16.msra.mxu0 %v435
        %481 = vmatpush.bf16.msra.mxu0 %v433
        %482 = vmatpush.bf16.msra.mxu0 %v431
        %483 = vmatmul.bf16.gmra.mxu0 %v381
        %v484 = vpop.f32.mrf.mxu0
        %v485 = vadd.f32 0.0, %v484
        %v486 = vpop.f32.mrf.mxu0
        %487 = vdwg.mxu0
        %488 = vst [vmem:[%s272] sm:$0xff] %v380
        %v489 = vadd.f32 %v485, %v305
        %490 = vst [vmem:[%s265] sm:$0xff] %v489
        %s491 = scalar_lea.vmem %s277, 8
        %v492 = vld [vmem:[%s491] sm:$0xff]
        %v493 = vadd.f32 %v492, %v472
        %v494 = vtanh.pop %v493
        %s495 = scalar_lea.vmem %s283, 8
        %v496 = vld [vmem:[%s495] sm:$0xff]
        %v497 = vmul.f32 %v494, %v496
        %v498 = vpack.c.bf16 %v497, %v497
        %499 = vmatpush.bf16.msra.mxu0 %v444
        %500 = vmatpush.bf16.msra.mxu0 %v442
        %501 = vmatpush.bf16.msra.mxu0 %v440
        %502 = vmatpush.bf16.msra.mxu0 %v438
        %503 = vmatpush.bf16.msra.mxu0 %v436
        %504 = vmatpush.bf16.msra.mxu0 %v434
        %505 = vmatpush.bf16.msra.mxu0 %v432
        %506 = vmatpush.bf16.msra.mxu0 %v430
        %507 = vmatmul.bf16.gmra.mxu0 %v498
        %v508 = vpop.f32.mrf.mxu0
        %v509 = vadd.f32 0.0, %v508
        %v510 = vpop.f32.mrf.mxu0
        %511 = vdwg.mxu0
        %512 = vmatpush.bf16.msra.mxu0 %v445
        %513 = vmatpush.bf16.msra.mxu0 %v443
        %514 = vmatpush.bf16.msra.mxu0 %v441
        %515 = vmatpush.bf16.msra.mxu0 %v439
        %516 = vmatpush.bf16.msra.mxu0 %v437
        %517 = vmatpush.bf16.msra.mxu0 %v435
        %518 = vmatpush.bf16.msra.mxu0 %v433
        %519 = vmatpush.bf16.msra.mxu0 %v431
        %520 = vmatmul.bf16.gmra.mxu0 %v498
        %v521 = vpop.f32.mrf.mxu0
        %v522 = vadd.f32 0.0, %v521
        %v523 = vpop.f32.mrf.mxu0
        %524 = vdwg.mxu0
        %s525 = scalar_lea.vmem %s272, 8 [#allocation5]
        %526 = vst [vmem:[%s525] sm:$0xff] %v497
        %v527 = vadd.f32 %v522, %v305
        %s528 = scalar_lea.vmem %s265, 8 [#allocation3]
        %529 = vst [vmem:[%s528] sm:$0xff] %v527
        %s530 = scalar_lea.vmem %s277, 16
        %v531 = vld [vmem:[%s530] sm:$0xff]
        %v532 = vadd.f32 %v531, %v509
        %v533 = vtanh.pop %v532
        %s534 = scalar_lea.vmem %s283, 16
        %v535 = vld [vmem:[%s534] sm:$0xff]
        %v536 = vmul.f32 %v533, %v535
        %v537 = vpack.c.bf16 %v536, %v536
        %538 = vmatpush.bf16.msra.mxu0 %v444
        %539 = vmatpush.bf16.msra.mxu0 %v442
        %540 = vmatpush.bf16.msra.mxu0 %v440
        %541 = vmatpush.bf16.msra.mxu0 %v438
        %542 = vmatpush.bf16.msra.mxu0 %v436
        %543 = vmatpush.bf16.msra.mxu0 %v434
        %544 = vmatpush.bf16.msra.mxu0 %v432
        %545 = vmatpush.bf16.msra.mxu0 %v430
        %546 = vmatmul.bf16.gmra.mxu0 %v537
        %v547 = vpop.f32.mrf.mxu0
        %v548 = vadd.f32 0.0, %v547
        %v549 = vpop.f32.mrf.mxu0
        %550 = vdwg.mxu0
        %551 = vmatpush.bf16.msra.mxu0 %v445
        %552 = vmatpush.bf16.msra.mxu0 %v443
        %553 = vmatpush.bf16.msra.mxu0 %v441
        %554 = vmatpush.bf16.msra.mxu0 %v439
        %555 = vmatpush.bf16.msra.mxu0 %v437
        %556 = vmatpush.bf16.msra.mxu0 %v435
        %557 = vmatpush.bf16.msra.mxu0 %v433
        %558 = vmatpush.bf16.msra.mxu0 %v431
        %559 = vmatmul.bf16.gmra.mxu0 %v537
        %v560 = vpop.f32.mrf.mxu0
        %v561 = vadd.f32 0.0, %v560
        %v562 = vpop.f32.mrf.mxu0
        %563 = vdwg.mxu0
        %s564 = scalar_lea.vmem %s272, 16 [#allocation5]
        %565 = vst [vmem:[%s564] sm:$0xff] %v536
        %v566 = vadd.f32 %v561, %v305
        %s567 = scalar_lea.vmem %s265, 16 [#allocation3]
        %568 = vst [vmem:[%s567] sm:$0xff] %v566
        %s569 = scalar_lea.vmem %s277, 24
        %v570 = vld [vmem:[%s569] sm:$0xff]
        %v571 = vadd.f32 %v570, %v548
        %v572 = vtanh.pop %v571
        %s573 = scalar_lea.vmem %s283, 24
        %v574 = vld [vmem:[%s573] sm:$0xff]
        %v575 = vmul.f32 %v572, %v574
        %v576 = vpack.c.bf16 %v575, %v575
        %577 = vmatpush.bf16.msra.mxu0 %v444
        %578 = vmatpush.bf16.msra.mxu0 %v442
        %579 = vmatpush.bf16.msra.mxu0 %v440
        %580 = vmatpush.bf16.msra.mxu0 %v438
        %581 = vmatpush.bf16.msra.mxu0 %v436
        %582 = vmatpush.bf16.msra.mxu0 %v434
        %583 = vmatpush.bf16.msra.mxu0 %v432
        %584 = vmatpush.bf16.msra.mxu0 %v430
        %585 = vmatmul.bf16.gmra.mxu0 %v576
        %v586 = vpop.f32.mrf.mxu0
        %v587 = vadd.f32 0.0, %v586
        %v588 = vpop.f32.mrf.mxu0
        %589 = vdwg.mxu0
        %590 = vmatpush.bf16.msra.mxu0 %v445
        %591 = vmatpush.bf16.msra.mxu0 %v443
        %592 = vmatpush.bf16.msra.mxu0 %v441
        %593 = vmatpush.bf16.msra.mxu0 %v439
        %594 = vmatpush.bf16.msra.mxu0 %v437
        %595 = vmatpush.bf16.msra.mxu0 %v435
        %596 = vmatpush.bf16.msra.mxu0 %v433
        %597 = vmatpush.bf16.msra.mxu0 %v431
        %598 = vmatmul.bf16.gmra.mxu0 %v576
        %v599 = vpop.f32.mrf.mxu0
        %v600 = vadd.f32 0.0, %v599
        %v601 = vpop.f32.mrf.mxu0
        %602 = vdwg.mxu0
        %s603 = scalar_lea.vmem %s272, 24 [#allocation5]
        %604 = vst [vmem:[%s603] sm:$0xff] %v575
        %v605 = vadd.f32 %v600, %v305
        %s606 = scalar_lea.vmem %s265, 24 [#allocation3]
        %607 = vst [vmem:[%s606] sm:$0xff] %v605
        %s608 = scalar_lea.vmem %s277, 32
        %v609 = vld [vmem:[%s608] sm:$0xff]
        %v610 = vadd.f32 %v609, %v587
        %v611 = vtanh.pop %v610
        %s612 = scalar_lea.vmem %s283, 32
        %v613 = vld [vmem:[%s612] sm:$0xff]
        %v614 = vmul.f32 %v611, %v613
        %v615 = vpack.c.bf16 %v614, %v614
        %616 = vmatpush.bf16.msra.mxu0 %v444
        %617 = vmatpush.bf16.msra.mxu0 %v442
        %618 = vmatpush.bf16.msra.mxu0 %v440
        %619 = vmatpush.bf16.msra.mxu0 %v438
        %620 = vmatpush.bf16.msra.mxu0 %v436
        %621 = vmatpush.bf16.msra.mxu0 %v434
        %622 = vmatpush.bf16.msra.mxu0 %v432
        %623 = vmatpush.bf16.msra.mxu0 %v430
        %624 = vmatmul.bf16.gmra.mxu0 %v615
        %v625 = vpop.f32.mrf.mxu0
        %v626 = vadd.f32 0.0, %v625
        %v627 = vpop.f32.mrf.mxu0
        %628 = vdwg.mxu0
        %629 = vmatpush.bf16.msra.mxu0 %v445
        %630 = vmatpush.bf16.msra.mxu0 %v443
        %631 = vmatpush.bf16.msra.mxu0 %v441
        %632 = vmatpush.bf16.msra.mxu0 %v439
        %633 = vmatpush.bf16.msra.mxu0 %v437
        %634 = vmatpush.bf16.msra.mxu0 %v435
        %635 = vmatpush.bf16.msra.mxu0 %v433
        %636 = vmatpush.bf16.msra.mxu0 %v431
        %637 = vmatmul.bf16.gmra.mxu0 %v615
        %v638 = vpop.f32.mrf.mxu0
        %v639 = vadd.f32 0.0, %v638
        %v640 = vpop.f32.mrf.mxu0
        %641 = vdwg.mxu0
        %s642 = scalar_lea.vmem %s272, 32 [#allocation5]
        %643 = vst [vmem:[%s642] sm:$0xff] %v614
        %v644 = vadd.f32 %v639, %v305
        %s645 = scalar_lea.vmem %s265, 32 [#allocation3]
        %646 = vst [vmem:[%s645] sm:$0xff] %v644
        %s647 = scalar_lea.vmem %s277, 40
        %v648 = vld [vmem:[%s647] sm:$0xff]
        %v649 = vadd.f32 %v648, %v626
        %v650 = vtanh.pop %v649
        %s651 = scalar_lea.vmem %s283, 40
        %v652 = vld [vmem:[%s651] sm:$0xff]
        %v653 = vmul.f32 %v650, %v652
        %v654 = vpack.c.bf16 %v653, %v653
        %655 = vmatpush.bf16.msra.mxu0 %v444
        %656 = vmatpush.bf16.msra.mxu0 %v442
        %657 = vmatpush.bf16.msra.mxu0 %v440
        %658 = vmatpush.bf16.msra.mxu0 %v438
        %659 = vmatpush.bf16.msra.mxu0 %v436
        %660 = vmatpush.bf16.msra.mxu0 %v434
        %661 = vmatpush.bf16.msra.mxu0 %v432
        %662 = vmatpush.bf16.msra.mxu0 %v430
        %663 = vmatmul.bf16.gmra.mxu0 %v654
        %v664 = vpop.f32.mrf.mxu0
        %v665 = vadd.f32 0.0, %v664
        %v666 = vpop.f32.mrf.mxu0
        %667 = vdwg.mxu0
        %668 = vmatpush.bf16.msra.mxu0 %v445
        %669 = vmatpush.bf16.msra.mxu0 %v443
        %670 = vmatpush.bf16.msra.mxu0 %v441
        %671 = vmatpush.bf16.msra.mxu0 %v439
        %672 = vmatpush.bf16.msra.mxu0 %v437
        %673 = vmatpush.bf16.msra.mxu0 %v435
        %674 = vmatpush.bf16.msra.mxu0 %v433
        %675 = vmatpush.bf16.msra.mxu0 %v431
        %676 = vmatmul.bf16.gmra.mxu0 %v654
        %v677 = vpop.f32.mrf.mxu0
        %v678 = vadd.f32 0.0, %v677
        %v679 = vpop.f32.mrf.mxu0
        %680 = vdwg.mxu0
        %s681 = scalar_lea.vmem %s272, 40 [#allocation5]
        %682 = vst [vmem:[%s681] sm:$0xff] %v653
        %v683 = vadd.f32 %v678, %v305
        %s684 = scalar_lea.vmem %s265, 40 [#allocation3]
        %685 = vst [vmem:[%s684] sm:$0xff] %v683
        %s686 = scalar_lea.vmem %s277, 48
        %v687 = vld [vmem:[%s686] sm:$0xff]
        %v688 = vadd.f32 %v687, %v665
        %v689 = vtanh.pop %v688
        %s690 = scalar_lea.vmem %s283, 48
        %v691 = vld [vmem:[%s690] sm:$0xff]
        %v692 = vmul.f32 %v689, %v691
        %v693 = vpack.c.bf16 %v692, %v692
        %694 = vmatpush.bf16.msra.mxu0 %v444
        %695 = vmatpush.bf16.msra.mxu0 %v442
        %696 = vmatpush.bf16.msra.mxu0 %v440
        %697 = vmatpush.bf16.msra.mxu0 %v438
        %698 = vmatpush.bf16.msra.mxu0 %v436
        %699 = vmatpush.bf16.msra.mxu0 %v434
        %700 = vmatpush.bf16.msra.mxu0 %v432
        %701 = vmatpush.bf16.msra.mxu0 %v430
        %702 = vmatmul.bf16.gmra.mxu0 %v693
        %v703 = vpop.f32.mrf.mxu0
        %v704 = vadd.f32 0.0, %v703
        %v705 = vpop.f32.mrf.mxu0
        %706 = vdwg.mxu0
        %707 = vmatpush.bf16.msra.mxu0 %v445
        %708 = vmatpush.bf16.msra.mxu0 %v443
        %709 = vmatpush.bf16.msra.mxu0 %v441
        %710 = vmatpush.bf16.msra.mxu0 %v439
        %711 = vmatpush.bf16.msra.mxu0 %v437
        %712 = vmatpush.bf16.msra.mxu0 %v435
        %713 = vmatpush.bf16.msra.mxu0 %v433
        %714 = vmatpush.bf16.msra.mxu0 %v431
        %715 = vmatmul.bf16.gmra.mxu0 %v693
        %v716 = vpop.f32.mrf.mxu0
        %v717 = vadd.f32 0.0, %v716
        %v718 = vpop.f32.mrf.mxu0
        %719 = vdwg.mxu0
        %s720 = scalar_lea.vmem %s272, 48 [#allocation5]
        %721 = vst [vmem:[%s720] sm:$0xff] %v692
        %v722 = vadd.f32 %v717, %v305
        %s723 = scalar_lea.vmem %s265, 48 [#allocation3]
        %724 = vst [vmem:[%s723] sm:$0xff] %v722
        %s725 = scalar_lea.vmem %s277, 56
        %v726 = vld [vmem:[%s725] sm:$0xff]
        %v727 = vadd.f32 %v726, %v704
        %v728 = vtanh.pop %v727
        %s729 = scalar_lea.vmem %s283, 56
        %v730 = vld [vmem:[%s729] sm:$0xff]
        %v731 = vmul.f32 %v728, %v730
        %v732 = vpack.c.bf16 %v731, %v731
        %733 = vmatpush.bf16.msra.mxu0 %v444
        %734 = vmatpush.bf16.msra.mxu0 %v442
        %735 = vmatpush.bf16.msra.mxu0 %v440
        %736 = vmatpush.bf16.msra.mxu0 %v438
        %737 = vmatpush.bf16.msra.mxu0 %v436
        %738 = vmatpush.bf16.msra.mxu0 %v434
        %739 = vmatpush.bf16.msra.mxu0 %v432
        %740 = vmatpush.bf16.msra.mxu0 %v430
        %741 = vmatmul.bf16.gmra.mxu0 %v732
        %v742 = vpop.f32.mrf.mxu0
        %v743 = vadd.f32 0.0, %v742
        %v744 = vpop.f32.mrf.mxu0
        %745 = vdwg.mxu0
        %746 = vmatpush.bf16.msra.mxu0 %v445
        %747 = vmatpush.bf16.msra.mxu0 %v443
        %748 = vmatpush.bf16.msra.mxu0 %v441
        %749 = vmatpush.bf16.msra.mxu0 %v439
        %750 = vmatpush.bf16.msra.mxu0 %v437
        %751 = vmatpush.bf16.msra.mxu0 %v435
        %752 = vmatpush.bf16.msra.mxu0 %v433
        %753 = vmatpush.bf16.msra.mxu0 %v431
        %754 = vmatmul.bf16.gmra.mxu0 %v732
        %v755 = vpop.f32.mrf.mxu0
        %v756 = vadd.f32 0.0, %v755
        %v757 = vpop.f32.mrf.mxu0
        %758 = vdwg.mxu0
        %s759 = scalar_lea.vmem %s272, 56 [#allocation5]
        %760 = vst [vmem:[%s759] sm:$0xff] %v731
        %v761 = vadd.f32 %v756, %v305
        %s762 = scalar_lea.vmem %s265, 56 [#allocation3]
        %763 = vst [vmem:[%s762] sm:$0xff] %v761
        %764 = vst [vmem:[#allocation2] sm:$0xff] %v743
        %s765 = sand.u32 %s147, 1
        %s766 = scalar_lea.sflag [#allocation4], %s765
        %s767 = sand.u32 %s147, 1
        %s768 = smul.addr %s767, 64
        %s769 = scalar_lea.vmem [#allocation3], %s768
        %s770 = sand.u32 %s173, 1
        %s771 = scalar_lea.sflag [#allocation6], %s770
        %s772 = sand.u32 %s173, 1
        %s773 = smul.addr %s772, 64
        %s774 = scalar_lea.vmem [#allocation5], %s773
        // Predicated region
        $region45: #{rnn_forward_seq.1} parent=39 // pred_check
          %p775 = pneg %p157
        $region46: #{rnn_forward_seq.1} parent=39 // pred_check_branch
          %777 = sbr.rel (%p775) target = $region48
        $region47: #{rnn_forward_seq.1} parent=39 // pred_region
          %s778 = smul.u32 8, %s24
          %780 = vsyncadd %s766, 0
          %s781 = smul.addr %s778, 8
          %s782 = scalar_lea.hbm %s5, %s781
          %s783 = sshll.u32 %s769, 4
          %s784 = int_to_ptr.vmem [resolvable:$true] %s783
          %s785 = sshll.u32 %s782, 4
          %s786 = int_to_ptr.hbm [resolvable:$true] %s785
          %791 = dma.vmem_to_hbm [thread:$0]  %s784, 1024, %s786, %s766, 128, 128, 8
        $region48: #{rnn_forward_seq.1} parent=39 // pred_fallthru
          _
        // Predicated region
        $region49: #{rnn_forward_seq.1} parent=39 // pred_check
          %p792 = pneg %p183
        $region50: #{rnn_forward_seq.1} parent=39 // pred_check_branch
          %794 = sbr.rel (%p792) target = $region52
        $region51: #{rnn_forward_seq.1} parent=39 // pred_region
          %s795 = smul.u32 8, %s24
          %797 = vsyncadd %s771, 0
          %s798 = smul.addr %s795, 8
          %s799 = scalar_lea.hbm %s6, %s798
          %s800 = sshll.u32 %s774, 4
          %s801 = int_to_ptr.vmem [resolvable:$true] %s800
          %s802 = sshll.u32 %s799, 4
          %s803 = int_to_ptr.hbm [resolvable:$true] %s802
          %808 = dma.vmem_to_hbm [thread:$0]  %s801, 1024, %s803, %s771, 128, 128, 8
        $region52: #{rnn_forward_seq.1} parent=39 // pred_fallthru
          _
      $region40: #{rnn_forward_seq.1} parent=5 // pred_fallthru
        _
      %p809 = scmp.le.s32.totalorder 2, %s19
      // Predicated region
      $region53: #{rnn_forward_seq.1} parent=5 // pred_check
        %p810 = pneg %p809
      $region54: #{rnn_forward_seq.1} parent=5 // pred_check_branch
        %812 = sbr.rel (%p810) target = $region56
      $region55: #{rnn_forward_seq.1} parent=5 // pred_region
        %s813 = ssub.s32 %s19, 2
        // Predicated region
        $region57: #{rnn_forward_seq.1} parent=55 // pred_check
          %p814 = pneg %p163
        $region58: #{rnn_forward_seq.1} parent=55 // pred_check_branch
          %816 = sbr.rel (%p814) target = $region60
        $region59: #{rnn_forward_seq.1} parent=55 // pred_region
          %s817 = sand.u32 %s148, 1
          %s818 = scalar_lea.sflag [#allocation4], %s817
          %s819 = sand.u32 %s148, 1
          %s820 = smul.addr %s819, 64
          %s821 = scalar_lea.vmem [#allocation3], %s820
          %823 = dma.done %s818, 1024
        $region60: #{rnn_forward_seq.1} parent=55 // pred_fallthru
          _
        // Predicated region
        $region61: #{rnn_forward_seq.1} parent=55 // pred_check
          %p824 = pneg %p189
        $region62: #{rnn_forward_seq.1} parent=55 // pred_check_branch
          %826 = sbr.rel (%p824) target = $region64
        $region63: #{rnn_forward_seq.1} parent=55 // pred_region
          %s827 = sand.u32 %s174, 1
          %s828 = scalar_lea.sflag [#allocation6], %s827
          %s829 = sand.u32 %s174, 1
          %s830 = smul.addr %s829, 64
          %s831 = scalar_lea.vmem [#allocation5], %s830
          %833 = dma.done %s828, 1024
        $region64: #{rnn_forward_seq.1} parent=55 // pred_fallthru
          _
      $region56: #{rnn_forward_seq.1} parent=5 // pred_fallthru
        _
    $region6: #{rnn_forward_seq.1} parent=1 // loop_footer
      %s23 = sadd.s32 1, %s19
    $region7: #{rnn_forward_seq.1} parent=1 // loop_footer_branch
      %18 = sbr.rel target = $region3
    $region8: #{rnn_forward_seq.1} parent=1 // loop_exit
      _
    %834 = vsyncpa [#allocation4], 1
    %s835 = scalar_lea.sflag [#allocation4], 1
    %836 = vsyncpa %s835, 1
    %837 = vsyncpa [#allocation6], 1
    %s838 = scalar_lea.sflag [#allocation6], 1
    %839 = vsyncpa %s838, 1

</llo_original>
